<compile_context>
chip_gen: v7x
topology: tpu7x:2x2x1
jax: 0.10.0
libtpu: 0.0.40
codegen_flags: <defaults>
</compile_context>

<pallas_src>
import jax
import jax.numpy as jnp
from jax.experimental import pallas as pl
from jax.experimental.pallas import tpu as pltpu


def _relu_conv1x1_kernel(w_ref, x_ref, o_ref):
    # w_ref: [C_out, C_in] (bf16), x_ref: [C_in, m_tile] (bf16), o_ref: [C_out, m_tile] (f32)
    # ReLU directly on the loaded values (exact in any dtype; v5e's compiler widens
    # bf16 elementwise ops to f32 automatically, v6e/v7x run it natively in bf16).
    x = jnp.maximum(x_ref[...], 0)
    o_ref[...] = jnp.dot(
        w_ref[...], x, preferred_element_type=jnp.float32
    ).astype(o_ref.dtype)


def _pick_m_tile(M, c_in, c_out, x_itemsize, out_itemsize, vmem_budget_bytes=8 << 20):
    """Choose the spatial (lane) tile width.

    Small or non-128-divisible M -> one full-extent block (always BlockSpec-legal).
    Large 128-divisible M -> the *largest* multiple-of-128 divisor of M whose
    double-buffered x+out tiles stay under the VMEM budget.  Never silently fall
    back to a 128-wide tile (~29% of HBM roofline vs ~85% at 512+).
    """
    if M <= 2048 or M % 128 != 0:
        return M
    per_lane_bytes = 2 * (c_in * x_itemsize + c_out * out_itemsize)  # double-buffered
    for d in range(M // 128, 0, -1):
        t = 128 * d
        if M % t == 0 and t * per_lane_bytes <= vmem_budget_bytes:
            return t
    return M  # unreachable in practice


def relu_conv1x1(x_nchw, weight, *, compute_dtype=jnp.bfloat16):
    """Fused ReLU + 1x1 conv, no bias.

    x_nchw: [N, C_in, H, W] float32
    weight: [C_out, C_in] or [C_out, C_in, 1, 1] (PyTorch Conv2d weight)
    returns: [N, C_out, H, W] float32 (module output dtype preserved)
    """
    N, C_in, H, W = x_nchw.shape
    C_out = weight.shape[0]
    M = H * W
    out_dtype = x_nchw.dtype

    weight_oi = weight.reshape(C_out, C_in).astype(compute_dtype)
    # Pure reshape (no transpose) NCHW -> [N, C_in, H*W]; bf16 halves the HBM bytes
    # of the streaming operand (in a full network this convert fuses upstream).
    x3 = x_nchw.reshape(N, C_in, M).astype(compute_dtype)

    x_itemsize = jnp.dtype(compute_dtype).itemsize
    out_itemsize = jnp.dtype(out_dtype).itemsize
    m_tile = _pick_m_tile(M, C_in, C_out, x_itemsize, out_itemsize)
    m_steps = M // m_tile
    grid = (N, m_steps)

    # Triple-buffer the streaming x operand only when there is actually a pipeline
    # to hide (m_steps > 1); the weight's constant index_map keeps it resident.
    x_spec_kwargs = {"pipeline_mode": pl.Buffered(3)} if m_steps > 1 else {}

    cost = pl.CostEstimate(
        flops=2 * N * M * C_in * C_out,
        transcendentals=0,
        bytes_accessed=(
            x3.size * x_itemsize
            + weight_oi.size * x_itemsize
            + N * C_out * M * out_itemsize
        ),
    )

    out3 = pl.pallas_call(
        _relu_conv1x1_kernel,
        out_shape=jax.ShapeDtypeStruct((N, C_out, M), out_dtype),
        grid=grid,
        in_specs=[
            # Weight: same block at every grid point -> stays resident in VMEM.
            pl.BlockSpec((C_out, C_in), lambda n, m: (0, 0)),
            # x: batch dim squeezed out of the kernel view; lane-dense spatial tile.
            pl.BlockSpec((None, C_in, m_tile), lambda n, m: (n, 0, m), **x_spec_kwargs),
        ],
        out_specs=pl.BlockSpec((None, C_out, m_tile), lambda n, m: (n, 0, m)),
        compiler_params=pltpu.CompilerParams(
            # N is independent (shards across TCs on v7x when N > 1); spatial axis
            # left "arbitrary" -- measured impact is ~0 and it keeps intent clear.
            dimension_semantics=("parallel", "arbitrary"),
        ),
        cost_estimate=cost,
    )(weight_oi, x3)

    # Pure reshape back to NCHW -- no transpose needed.
    return out3.reshape(N, C_out, H, W)


if __name__ == "__main__":
    key = jax.random.PRNGKey(0)
    k_x, k_w = jax.random.split(key)

    # Module-implied shapes: input [1, 48, 28, 28]; conv2d14: 48 -> 24, 1x1, no bias.
    x = jax.random.normal(k_x, (1, 48, 28, 28), dtype=jnp.float32)
    weight = jax.random.normal(k_w, (24, 48, 1, 1), dtype=jnp.float32) * 0.05

    y = jax.jit(relu_conv1x1)(x, weight)
    jax.block_until_ready(y)
    assert y.shape == (1, 24, 28, 28), y.shape
    assert y.dtype == jnp.float32, y.dtype

    # Bit-matched reference: identical bf16-rounded inputs, f32 accumulation.
    w2 = weight.reshape(24, 48)
    x_bf = jnp.maximum(x, 0.0).astype(jnp.bfloat16).astype(jnp.float32)
    w_bf = w2.astype(jnp.bfloat16).astype(jnp.float32)
    y_ref_bf = jnp.einsum("nchw,oc->nohw", x_bf, w_bf)
    assert jnp.allclose(y, y_ref_bf, atol=1e-4, rtol=1e-4), float(
        jnp.max(jnp.abs(y - y_ref_bf))
    )

    # Sanity vs the original full-f32 module semantics (bf16 input rounding -> looser tol).
    y_ref_f32 = jnp.einsum("nchw,oc->nohw", jnp.maximum(x, 0.0), w2)
    assert jnp.allclose(y, y_ref_f32, atol=3e-2, rtol=3e-2), float(
        jnp.max(jnp.abs(y - y_ref_f32))
    )

    print("KERNEL_OK")
</pallas_src>

<mosaic_0001>
module attributes {stable_mosaic.version = 11 : i64} {
  func.func @_relu_conv1x1_kernel(%arg0: i32, %arg1: i32, %arg2: memref<24x48xbf16, #tpu.memory_space<vmem>>, %arg3: memref<1x48x784xbf16, #tpu.memory_space<vmem>>, %arg4: memref<1x24x784xf32, #tpu.memory_space<vmem>>) attributes {dimension_semantics = [#tpu.dimension_semantics<parallel>, #tpu.dimension_semantics<arbitrary>], iteration_bounds = array<i64: 1, 1>, scalar_prefetch = 0 : i64, scratch_operands = 0 : i64, tpu.core_type = #tpu.core_type<tc>, window_params = [{pipeline_mode = #tpu.pipeline_mode<synchronous>, transform_indices = @transform_0, window_bounds = array<i64: 24, 48>}, {transform_indices = @transform_1, window_bounds = array<i64: 1, 48, 784>}, {transform_indices = @transform_2, window_bounds = array<i64: 1, 24, 784>}]} {
    %c0 = arith.constant 0 : index
    %c0_0 = arith.constant 0 : index
    %c0_1 = arith.constant 0 : index
    %0 = vector.load %arg3[%c0, %c0_0, %c0_1] : memref<1x48x784xbf16, #tpu.memory_space<vmem>>, vector<1x48x784xbf16>
    %1 = vector.shape_cast %0 : vector<1x48x784xbf16> to vector<48x784xbf16>
    %cst = arith.constant 0.000000e+00 : bf16
    %2 = vector.broadcast %cst : bf16 to vector<48x784xbf16>
    %3 = arith.maximumf %1, %2 : vector<48x784xbf16>
    %c0_2 = arith.constant 0 : index
    %c0_3 = arith.constant 0 : index
    %4 = vector.load %arg2[%c0_2, %c0_3] : memref<24x48xbf16, #tpu.memory_space<vmem>>, vector<24x48xbf16>
    %cst_4 = arith.constant dense<0.000000e+00> : vector<24x784xf32>
    %5 = tpu.matmul %4, %3, %cst_4 {dimension_numbers = #tpu.dot_dimension_numbers<[1], [0], [0], [1], [0, 0, 1, 1], [], []>} : vector<24x48xbf16>, vector<48x784xbf16>, vector<24x784xf32> -> vector<24x784xf32>
    %c0_5 = arith.constant 0 : index
    %c0_6 = arith.constant 0 : index
    %c0_7 = arith.constant 0 : index
    %6 = vector.load %arg4[%c0_5, %c0_6, %c0_7] : memref<1x24x784xf32, #tpu.memory_space<vmem>>, vector<1x24x784xf32>
    %7 = vector.shape_cast %6 : vector<1x24x784xf32> to vector<24x784xf32>
    %8 = vector.shape_cast %5 : vector<24x784xf32> to vector<1x24x784xf32>
    tpu.vector_store %arg4[%c0_5, %c0_6, %c0_7], %8 {strides = array<i32>} : memref<1x24x784xf32, #tpu.memory_space<vmem>>, vector<1x24x784xf32>,
    return
  }
  func.func @transform_0(%arg0: i32, %arg1: i32) -> (i32, i32) {
    %c0_i32 = arith.constant 0 : i32
    %c0_i32_0 = arith.constant 0 : i32
    %c0_i32_1 = arith.constant 0 : i32
    return %c0_i32, %c0_i32_0 : i32, i32
  }
  func.func @transform_1(%arg0: i32, %arg1: i32) -> (i32, i32, i32) {
    %c0_i32 = arith.constant 0 : i32
    %c0_i32_0 = arith.constant 0 : i32
    return %arg0, %c0_i32, %arg1 : i32, i32, i32
  }
  func.func @transform_2(%arg0: i32, %arg1: i32) -> (i32, i32, i32) {
    %c0_i32 = arith.constant 0 : i32
    %c0_i32_0 = arith.constant 0 : i32
    return %arg0, %c0_i32, %arg1 : i32, i32, i32
  }
}

</mosaic_0001>

<llo_original>
// kernel: relu_conv1x1.1
$region0: #{relu_conv1x1.1}
  #allocation0 [shape = 'u32[]', space=smem, size = 0x4, offset = 0x4, fixed_abs, tag = 'smem constant byte address 0x4 - core index']
  #allocation1 [shape = 'u32[144,128]{1,0:T(1,128)}', space=vmem, size = 0x12000, scoped, tag = 'internal scratch']
  %s0 = inlined_call_operand.vmem [shape: bf16[24,48], index: 0, kind: input, shape index: {}]
  %s1 = inlined_call_operand.vmem [shape: bf16[1,48,784], index: 1, kind: input, shape index: {}]
  %s2 = inlined_call_operand.vmem [shape: f32[1,24,784], index: 2, kind: output, shape index: {}]
  %s3 = sld [smem:[#allocation0]]
  $region18: #{relu_conv1x1.1} parent=0
    _
  %s5 = ssub.s32 1, %s3
  %s6 = scalar_select 0, %s5, %s3
  // Predicated region
  $region2: #{relu_conv1x1.1} parent=0 // pred_check
    _
  $region3: #{relu_conv1x1.1} parent=0 // pred_check_branch
    %8 = sbr.rel (0) target = $region5
  $region4: #{relu_conv1x1.1} parent=0 // pred_region
    _
  $region5: #{relu_conv1x1.1} parent=0 // pred_fallthru
    _
  // Predicated region
  $region6: #{relu_conv1x1.1} parent=0 // pred_check
    _
  $region7: #{relu_conv1x1.1} parent=0 // pred_check_branch
    %10 = sbr.rel (0) target = $region9
  $region8: #{relu_conv1x1.1} parent=0 // pred_region
    _
  $region9: #{relu_conv1x1.1} parent=0 // pred_fallthru
    _
  %v12 = vld [vmem:[%s1] sm:$0xff]
  %v13 = vld [vmem:[%s1 + $0x8] sm:$0xff]
  %v14 = vld [vmem:[%s1 + $0x10] sm:$0xff]
  %v15 = vld [vmem:[%s1 + $0x18] sm:$0xf]
  %v16 = vld [vmem:[%s1 + $0x1c] sm:$0xff]
  %v17 = vld [vmem:[%s1 + $0x24] sm:$0xff]
  %v18 = vld [vmem:[%s1 + $0x2c] sm:$0xff]
  %v19 = vld [vmem:[%s1 + $0x34] sm:$0xf]
  %v20 = vld [vmem:[%s1 + $0x38] sm:$0xff]
  %v21 = vld [vmem:[%s1 + $0x40] sm:$0xff]
  %v22 = vld [vmem:[%s1 + $0x48] sm:$0xff]
  %v23 = vld [vmem:[%s1 + $0x50] sm:$0xf]
  %v24 = vld [vmem:[%s1 + $0x54] sm:$0xff]
  %v25 = vld [vmem:[%s1 + $0x5c] sm:$0xff]
  %v26 = vld [vmem:[%s1 + $0x64] sm:$0xff]
  %v27 = vld [vmem:[%s1 + $0x6c] sm:$0xf]
  %v28 = vld [vmem:[%s1 + $0x70] sm:$0xff]
  %v29 = vld [vmem:[%s1 + $0x78] sm:$0xff]
  %v30 = vld [vmem:[%s1 + $0x80] sm:$0xff]
  %v31 = vld [vmem:[%s1 + $0x88] sm:$0xf]
  %v32 = vld [vmem:[%s1 + $0x8c] sm:$0xff]
  %v33 = vld [vmem:[%s1 + $0x94] sm:$0xff]
  %v34 = vld [vmem:[%s1 + $0x9c] sm:$0xff]
  %v35 = vld [vmem:[%s1 + $0xa4] sm:$0xf]
  %v36 = vmax.bf16 %v12, 0
  %v37 = vmax.bf16 %v13, 0
  %v38 = vmax.bf16 %v14, 0
  %v39 = vmax.bf16 %v15, 0
  %v40 = vmax.bf16 %v16, 0
  %v41 = vmax.bf16 %v17, 0
  %v42 = vmax.bf16 %v18, 0
  %v43 = vmax.bf16 %v19, 0
  %v44 = vmax.bf16 %v20, 0
  %v45 = vmax.bf16 %v21, 0
  %v46 = vmax.bf16 %v22, 0
  %v47 = vmax.bf16 %v23, 0
  %v48 = vmax.bf16 %v24, 0
  %v49 = vmax.bf16 %v25, 0
  %v50 = vmax.bf16 %v26, 0
  %v51 = vmax.bf16 %v27, 0
  %v52 = vmax.bf16 %v28, 0
  %v53 = vmax.bf16 %v29, 0
  %v54 = vmax.bf16 %v30, 0
  %v55 = vmax.bf16 %v31, 0
  %v56 = vmax.bf16 %v32, 0
  %v57 = vmax.bf16 %v33, 0
  %v58 = vmax.bf16 %v34, 0
  %v59 = vmax.bf16 %v35, 0
  %v60 = vld [vmem:[%s0] sm:$0xf]
  %v61 = vld [vmem:[%s0 + $0x4] sm:$0xf]
  %v62 = vld [vmem:[%s0 + $0x8] sm:$0xf]
  %v66 = vunpack.c.l.b16 %v60
  %v67 = vunpack.c.l.b16 %v61
  %v68 = vunpack.c.l.b16 %v62
  %v69 = vpack.c.b16 %v67, %v66
  %v70 = vpack.c.b16 %v68, %v68
  %v95 = vunpack.c.l.b16 %v36
  %v96 = vunpack.c.h.b16 %v36
  %v97 = vunpack.c.l.b16 %v37
  %v98 = vunpack.c.h.b16 %v37
  %v99 = vunpack.c.l.b16 %v38
  %v100 = vunpack.c.h.b16 %v38
  %v101 = vunpack.c.l.b16 %v39
  %v102 = vunpack.c.l.b16 %v40
  %v103 = vunpack.c.h.b16 %v40
  %v104 = vunpack.c.l.b16 %v41
  %v105 = vunpack.c.h.b16 %v41
  %v106 = vunpack.c.l.b16 %v42
  %v107 = vunpack.c.h.b16 %v42
  %v108 = vunpack.c.l.b16 %v43
  %v109 = vunpack.c.l.b16 %v44
  %v110 = vunpack.c.h.b16 %v44
  %v111 = vunpack.c.l.b16 %v45
  %v112 = vunpack.c.h.b16 %v45
  %v113 = vunpack.c.l.b16 %v46
  %v114 = vunpack.c.h.b16 %v46
  %v115 = vunpack.c.l.b16 %v47
  %v116 = vunpack.c.l.b16 %v48
  %v117 = vunpack.c.h.b16 %v48
  %v118 = vunpack.c.l.b16 %v49
  %v119 = vunpack.c.h.b16 %v49
  %v120 = vunpack.c.l.b16 %v50
  %v121 = vunpack.c.h.b16 %v50
  %v122 = vunpack.c.l.b16 %v51
  %v123 = vunpack.c.l.b16 %v52
  %v124 = vunpack.c.h.b16 %v52
  %v125 = vunpack.c.l.b16 %v53
  %v126 = vunpack.c.h.b16 %v53
  %v127 = vunpack.c.l.b16 %v54
  %v128 = vunpack.c.h.b16 %v54
  %v129 = vunpack.c.l.b16 %v55
  %v130 = vunpack.c.l.b16 %v56
  %v131 = vunpack.c.h.b16 %v56
  %v132 = vunpack.c.l.b16 %v57
  %v133 = vunpack.c.h.b16 %v57
  %v134 = vunpack.c.l.b16 %v58
  %v135 = vunpack.c.h.b16 %v58
  %v136 = vunpack.c.l.b16 %v59
  %v137 = vpack.c.b16 %v102, %v95
  %v138 = vpack.c.b16 %v103, %v96
  %v139 = vpack.c.b16 %v104, %v97
  %v140 = vpack.c.b16 %v105, %v98
  %v141 = vpack.c.b16 %v106, %v99
  %v142 = vpack.c.b16 %v107, %v100
  %v143 = vpack.c.b16 %v108, %v101
  %v144 = vpack.c.b16 %v116, %v109
  %v145 = vpack.c.b16 %v117, %v110
  %v146 = vpack.c.b16 %v118, %v111
  %v147 = vpack.c.b16 %v119, %v112
  %v148 = vpack.c.b16 %v120, %v113
  %v149 = vpack.c.b16 %v121, %v114
  %v150 = vpack.c.b16 %v122, %v115
  %v151 = vpack.c.b16 %v130, %v123
  %v152 = vpack.c.b16 %v131, %v124
  %v153 = vpack.c.b16 %v132, %v125
  %v154 = vpack.c.b16 %v133, %v126
  %v155 = vpack.c.b16 %v134, %v127
  %v156 = vpack.c.b16 %v135, %v128
  %v157 = vpack.c.b16 %v136, %v129
  %vm179 = vcmask 392192
  %v181 = vsel %vm179, %v69, 0
  %v184 = vsel %vm179, %v70, 0
  %186 = vmatprep.subr.bf16.mxu0 %v138
  %187 = vmatpush1.bf16.msra.mxu0 %v137
  %188 = vmatprep.subr.bf16.mxu0 %v145
  %189 = vmatpush1.bf16.msra.mxu0 %v144
  %190 = vmatprep.subr.bf16.mxu0 %v152
  %191 = vmatpush1.bf16.msra.mxu0 %v151
  %192 = vmatprep.subr.bf16.mxu0 0
  %193 = vmatpush1.bf16.msra.mxu0 0
  %194 = vmatprep.subr.bf16.mxu0 0
  %195 = vmatpush1.bf16.msra.mxu0 0
  %196 = vmatprep.subr.bf16.mxu0 0
  %197 = vmatpush1.bf16.msra.mxu0 0
  %198 = vmatprep.subr.bf16.mxu0 0
  %199 = vmatpush1.bf16.msra.mxu0 0
  %200 = vmatprep.subr.bf16.mxu0 0
  %201 = vmatpush1.bf16.msra.mxu0 0
  %202 = vmatprep.subr.bf16.mxu0 0
  %203 = vmatpush1.bf16.msra.mxu0 0
  %204 = vmatprep.subr.bf16.mxu0 0
  %205 = vmatpush1.bf16.msra.mxu0 0
  %206 = vmatprep.subr.bf16.mxu0 0
  %207 = vmatpush1.bf16.msra.mxu0 0
  %208 = vmatprep.subr.bf16.mxu0 0
  %209 = vmatpush1.bf16.msra.mxu0 0
  %210 = vmatprep.subr.bf16.mxu0 0
  %211 = vmatpush1.bf16.msra.mxu0 0
  %212 = vmatprep.subr.bf16.mxu0 0
  %213 = vmatpush1.bf16.msra.mxu0 0
  %214 = vmatprep.subr.bf16.mxu0 0
  %215 = vmatpush1.bf16.msra.mxu0 0
  %216 = vmatprep.subr.bf16.mxu0 0
  %217 = vmatpush1.bf16.msra.mxu0 0
  %218 = vmatprep.mubr.bf16.mxu0 0
  %219 = vmatmul.mubr.bf16.gmra.mrb[0].mxu0 %v181
  %v220 = vpop.f32.mrb[0].mxu0
  %v221 = vadd.f32 0.0, %v220
  %v222 = vpop.f32.mrb[0].mxu0
  %v223 = vadd.f32 0.0, %v222
  %v224 = vpop.f32.mrb[0].mxu0
  %v225 = vadd.f32 0.0, %v224
  %v226 = vpop.f32.mrb[0].mxu0
  %v227 = vadd.f32 0.0, %v226
  %228 = vmatprep.mubr.bf16.mxu0 0
  %229 = vmatmul.mubr.bf16.gmra.mrb[0].mxu0 %v184
  %v230 = vpop.f32.mrb[0].mxu0
  %v231 = vadd.f32 0.0, %v230
  %v232 = vpop.f32.mrb[0].mxu0
  %v233 = vadd.f32 0.0, %v232
  %v234 = vpop.f32.mrb[0].mxu0
  %v235 = vpop.f32.mrb[0].mxu0
  %236 = vdwg.mxu0
  %237 = vmatprep.subr.bf16.mxu0 %v140
  %238 = vmatpush1.bf16.msra.mxu0 %v139
  %239 = vmatprep.subr.bf16.mxu0 %v147
  %240 = vmatpush1.bf16.msra.mxu0 %v146
  %241 = vmatprep.subr.bf16.mxu0 %v154
  %242 = vmatpush1.bf16.msra.mxu0 %v153
  %243 = vmatprep.subr.bf16.mxu0 0
  %244 = vmatpush1.bf16.msra.mxu0 0
  %245 = vmatprep.subr.bf16.mxu0 0
  %246 = vmatpush1.bf16.msra.mxu0 0
  %247 = vmatprep.subr.bf16.mxu0 0
  %248 = vmatpush1.bf16.msra.mxu0 0
  %249 = vmatprep.subr.bf16.mxu0 0
  %250 = vmatpush1.bf16.msra.mxu0 0
  %251 = vmatprep.subr.bf16.mxu0 0
  %252 = vmatpush1.bf16.msra.mxu0 0
  %253 = vmatprep.subr.bf16.mxu0 0
  %254 = vmatpush1.bf16.msra.mxu0 0
  %255 = vmatprep.subr.bf16.mxu0 0
  %256 = vmatpush1.bf16.msra.mxu0 0
  %257 = vmatprep.subr.bf16.mxu0 0
  %258 = vmatpush1.bf16.msra.mxu0 0
  %259 = vmatprep.subr.bf16.mxu0 0
  %260 = vmatpush1.bf16.msra.mxu0 0
  %261 = vmatprep.subr.bf16.mxu0 0
  %262 = vmatpush1.bf16.msra.mxu0 0
  %263 = vmatprep.subr.bf16.mxu0 0
  %264 = vmatpush1.bf16.msra.mxu0 0
  %265 = vmatprep.subr.bf16.mxu0 0
  %266 = vmatpush1.bf16.msra.mxu0 0
  %267 = vmatprep.subr.bf16.mxu0 0
  %268 = vmatpush1.bf16.msra.mxu0 0
  %269 = vmatprep.mubr.bf16.mxu0 0
  %270 = vmatmul.mubr.bf16.gmra.mrb[0].mxu0 %v181
  %v271 = vpop.f32.mrb[0].mxu0
  %v272 = vadd.f32 0.0, %v271
  %v273 = vpop.f32.mrb[0].mxu0
  %v274 = vadd.f32 0.0, %v273
  %v275 = vpop.f32.mrb[0].mxu0
  %v276 = vadd.f32 0.0, %v275
  %v277 = vpop.f32.mrb[0].mxu0
  %v278 = vadd.f32 0.0, %v277
  %279 = vmatprep.mubr.bf16.mxu0 0
  %280 = vmatmul.mubr.bf16.gmra.mrb[0].mxu0 %v184
  %v281 = vpop.f32.mrb[0].mxu0
  %v282 = vadd.f32 0.0, %v281
  %v283 = vpop.f32.mrb[0].mxu0
  %v284 = vadd.f32 0.0, %v283
  %v285 = vpop.f32.mrb[0].mxu0
  %v286 = vpop.f32.mrb[0].mxu0
  %287 = vdwg.mxu0
  %288 = vmatprep.subr.bf16.mxu0 %v142
  %289 = vmatpush1.bf16.msra.mxu0 %v141
  %290 = vmatprep.subr.bf16.mxu0 %v149
  %291 = vmatpush1.bf16.msra.mxu0 %v148
  %292 = vmatprep.subr.bf16.mxu0 %v156
  %293 = vmatpush1.bf16.msra.mxu0 %v155
  %294 = vmatprep.subr.bf16.mxu0 0
  %295 = vmatpush1.bf16.msra.mxu0 0
  %296 = vmatprep.subr.bf16.mxu0 0
  %297 = vmatpush1.bf16.msra.mxu0 0
  %298 = vmatprep.subr.bf16.mxu0 0
  %299 = vmatpush1.bf16.msra.mxu0 0
  %300 = vmatprep.subr.bf16.mxu0 0
  %301 = vmatpush1.bf16.msra.mxu0 0
  %302 = vmatprep.subr.bf16.mxu0 0
  %303 = vmatpush1.bf16.msra.mxu0 0
  %304 = vmatprep.subr.bf16.mxu0 0
  %305 = vmatpush1.bf16.msra.mxu0 0
  %306 = vmatprep.subr.bf16.mxu0 0
  %307 = vmatpush1.bf16.msra.mxu0 0
  %308 = vmatprep.subr.bf16.mxu0 0
  %309 = vmatpush1.bf16.msra.mxu0 0
  %310 = vmatprep.subr.bf16.mxu0 0
  %311 = vmatpush1.bf16.msra.mxu0 0
  %312 = vmatprep.subr.bf16.mxu0 0
  %313 = vmatpush1.bf16.msra.mxu0 0
  %314 = vmatprep.subr.bf16.mxu0 0
  %315 = vmatpush1.bf16.msra.mxu0 0
  %316 = vmatprep.subr.bf16.mxu0 0
  %317 = vmatpush1.bf16.msra.mxu0 0
  %318 = vmatprep.subr.bf16.mxu0 0
  %319 = vmatpush1.bf16.msra.mxu0 0
  %320 = vmatprep.mubr.bf16.mxu0 0
  %321 = vmatmul.mubr.bf16.gmra.mrb[0].mxu0 %v181
  %v322 = vpop.f32.mrb[0].mxu0
  %v323 = vadd.f32 0.0, %v322
  %v324 = vpop.f32.mrb[0].mxu0
  %v325 = vadd.f32 0.0, %v324
  %v326 = vpop.f32.mrb[0].mxu0
  %v327 = vadd.f32 0.0, %v326
  %v328 = vpop.f32.mrb[0].mxu0
  %v329 = vadd.f32 0.0, %v328
  %330 = vmatprep.mubr.bf16.mxu0 0
  %331 = vmatmul.mubr.bf16.gmra.mrb[0].mxu0 %v184
  %v332 = vpop.f32.mrb[0].mxu0
  %v333 = vadd.f32 0.0, %v332
  %v334 = vpop.f32.mrb[0].mxu0
  %v335 = vadd.f32 0.0, %v334
  %v336 = vpop.f32.mrb[0].mxu0
  %v337 = vpop.f32.mrb[0].mxu0
  %338 = vdwg.mxu0
  %339 = vmatprep.subr.bf16.mxu0 0
  %340 = vmatpush1.bf16.msra.mxu0 %v143
  %341 = vmatprep.subr.bf16.mxu0 0
  %342 = vmatpush1.bf16.msra.mxu0 %v150
  %343 = vmatprep.subr.bf16.mxu0 0
  %344 = vmatpush1.bf16.msra.mxu0 %v157
  %345 = vmatprep.subr.bf16.mxu0 0
  %346 = vmatpush1.bf16.msra.mxu0 0
  %347 = vmatprep.subr.bf16.mxu0 0
  %348 = vmatpush1.bf16.msra.mxu0 0
  %349 = vmatprep.subr.bf16.mxu0 0
  %350 = vmatpush1.bf16.msra.mxu0 0
  %351 = vmatprep.subr.bf16.mxu0 0
  %352 = vmatpush1.bf16.msra.mxu0 0
  %353 = vmatprep.subr.bf16.mxu0 0
  %354 = vmatpush1.bf16.msra.mxu0 0
  %355 = vmatprep.subr.bf16.mxu0 0
  %356 = vmatpush1.bf16.msra.mxu0 0
  %357 = vmatprep.subr.bf16.mxu0 0
  %358 = vmatpush1.bf16.msra.mxu0 0
  %359 = vmatprep.subr.bf16.mxu0 0
  %360 = vmatpush1.bf16.msra.mxu0 0
  %361 = vmatprep.subr.bf16.mxu0 0
  %362 = vmatpush1.bf16.msra.mxu0 0
  %363 = vmatprep.subr.bf16.mxu0 0
  %364 = vmatpush1.bf16.msra.mxu0 0
  %365 = vmatprep.subr.bf16.mxu0 0
  %366 = vmatpush1.bf16.msra.mxu0 0
  %367 = vmatprep.subr.bf16.mxu0 0
  %368 = vmatpush1.bf16.msra.mxu0 0
  %369 = vmatprep.subr.bf16.mxu0 0
  %370 = vmatpush1.bf16.msra.mxu0 0
  %371 = vmatprep.mubr.bf16.mxu0 0
  %372 = vmatmul.mubr.bf16.gmra.mrb[0].mxu0 %v181
  %v373 = vpop.f32.mrb[0].mxu0
  %v374 = vadd.f32 0.0, %v373
  %v375 = vpop.f32.mrb[0].mxu0
  %v376 = vpop.f32.mrb[0].mxu0
  %v377 = vadd.f32 0.0, %v376
  %v378 = vpop.f32.mrb[0].mxu0
  %379 = vmatprep.mubr.bf16.mxu0 0
  %380 = vmatmul.mubr.bf16.gmra.mrb[0].mxu0 %v184
  %v381 = vpop.f32.mrb[0].mxu0
  %v382 = vadd.f32 0.0, %v381
  %v383 = vpop.f32.mrb[0].mxu0
  %v384 = vpop.f32.mrb[0].mxu0
  %v385 = vpop.f32.mrb[0].mxu0
  %386 = vdwg.mxu0
  %387 = vst [vmem:[%s2] sm:$0xff] %v221
  %388 = vst [vmem:[%s2 + $0x8] sm:$0xff] %v223
  %389 = vst [vmem:[%s2 + $0x10] sm:$0xff] %v272
  %390 = vst [vmem:[%s2 + $0x18] sm:$0xff] %v274
  %391 = vst [vmem:[%s2 + $0x20] sm:$0xff] %v323
  %392 = vst [vmem:[%s2 + $0x28] sm:$0xff] %v325
  %vm393 = vcmask 130048
  %394 = vst.msk [vmem:[%s2 + $0x30] sm:$0xff] %vm393, %v374
  %395 = vst [vmem:[%s2 + $0x38] sm:$0xff] %v225
  %396 = vst [vmem:[%s2 + $0x40] sm:$0xff] %v227
  %397 = vst [vmem:[%s2 + $0x48] sm:$0xff] %v276
  %398 = vst [vmem:[%s2 + $0x50] sm:$0xff] %v278
  %399 = vst [vmem:[%s2 + $0x58] sm:$0xff] %v327
  %400 = vst [vmem:[%s2 + $0x60] sm:$0xff] %v329
  %401 = vst.msk [vmem:[%s2 + $0x68] sm:$0xff] %vm393, %v377
  %402 = vst [vmem:[%s2 + $0x70] sm:$0xff] %v231
  %403 = vst [vmem:[%s2 + $0x78] sm:$0xff] %v233
  %404 = vst [vmem:[%s2 + $0x80] sm:$0xff] %v282
  %405 = vst [vmem:[%s2 + $0x88] sm:$0xff] %v284
  %406 = vst [vmem:[%s2 + $0x90] sm:$0xff] %v333
  %407 = vst [vmem:[%s2 + $0x98] sm:$0xff] %v335
  %408 = vst.msk [vmem:[%s2 + $0xa0] sm:$0xff] %vm393, %v382
  // Predicated region
  $region10: #{relu_conv1x1.1} parent=0 // pred_check
    _
  $region11: #{relu_conv1x1.1} parent=0 // pred_check_branch
    %410 = sbr.rel (0) target = $region13
  $region12: #{relu_conv1x1.1} parent=0 // pred_region
    _
  $region13: #{relu_conv1x1.1} parent=0 // pred_fallthru
    _
  // Predicated region
  $region14: #{relu_conv1x1.1} parent=0 // pred_check
    _
  $region15: #{relu_conv1x1.1} parent=0 // pred_check_branch
    %412 = sbr.rel (0) target = $region17
  $region16: #{relu_conv1x1.1} parent=0 // pred_region
    _
  $region17: #{relu_conv1x1.1} parent=0 // pred_fallthru
    _

</llo_original>
